<compile_context>
chip_gen: v6e
topology: v6e:2x2x1
jax: 0.10.0
libtpu: 0.0.40
codegen_flags: <defaults>
</compile_context>

<pallas_src>
import functools

import jax
import jax.numpy as jnp
import numpy as np
from jax.experimental import pallas as pl
from jax.experimental.pallas import tpu as pltpu


def _round_up(x, m):
    return ((x + m - 1) // m) * m


def _cdiv(a, b):
    return -(-a // b)


def _cp_bilinear_kernel(x1_ref, x2_ref, f1_ref, f2_ref, f0t_ref, b_ref, o_ref):
    # x1_ref : (tb, in1)      streamed batch tile (resident across the j sweep)
    # x2_ref : (tb, in2)      streamed batch tile (resident across the j sweep)
    # f1_ref : (in1, R)       resident
    # f2_ref : (in2, R)       resident
    # f0t_ref: (R, tn)        F0 pre-transposed, lane-padded slice
    # b_ref  : (1, tn)        bias slice (f32)
    # o_ref  : (tb, tn)
    p1 = jnp.dot(x1_ref[...], f1_ref[...], preferred_element_type=jnp.float32)   # (tb, R)
    p2 = jnp.dot(x2_ref[...], f2_ref[...], preferred_element_type=jnp.float32)   # (tb, R)
    prod = p1 * p2                                                                # (tb, R) f32
    out = jnp.dot(prod, f0t_ref[...], preferred_element_type=jnp.float32)         # (tb, tn)
    o_ref[...] = (out + b_ref[...]).astype(o_ref.dtype)


@functools.partial(
    jax.jit,
    static_argnames=("tb_max", "tn_max", "out_dtype", "input_buffers", "vmem_limit_bytes"),
)
def cp_bilinear(x1, x2, f0, f1, f2, bias=None, *, tb_max=1024, tn_max=None,
                out_dtype=None, input_buffers=2, vmem_limit_bytes=None):
    """CP-factored bilinear layer.

    x1:(B,in1), x2:(B,in2), f0:(out,R), f1:(in1,R), f2:(in2,R), bias:(out,) or None.
    Output dtype follows the activation dtype unless out_dtype is given explicitly.
    """
    B, in1 = x1.shape
    B2, in2 = x2.shape
    assert B == B2, "x1 / x2 batch mismatch"
    out_features, order = f0.shape
    assert f1.shape == (in1, order) and f2.shape == (in2, order)

    if out_dtype is None:
        out_dtype = jnp.result_type(x1.dtype, x2.dtype)
    out_dtype = jnp.dtype(out_dtype)

    # ---- batch tiling: even split, multiple-of-8 tiles, >=2 steps for v7x megacore ----
    n_b = _cdiv(B, tb_max)
    if n_b == 1 and B >= 16:
        n_b = 2                       # let the "parallel" axis shard across 2 TCs (v7x)
    tb = _round_up(_cdiv(B, n_b), 8)
    B_p = n_b * tb                    # pad waste is < n_b * 8 rows

    # ---- output tiling: lane-dense (multiple of 128); tile out_p so the
    #      double-buffered output block stays ~<= 8 MiB (fits v7x's 64 MiB VMEM) ----
    out_p = _round_up(out_features, 128)
    if tn_max is None:
        tn_max = max(128, ((4 * 1024 * 1024) // (tb * out_dtype.itemsize)) // 128 * 128)
    q = out_p // 128
    d = 1
    for cand in range(1, q + 1):      # largest 128-multiple divisor of out_p <= tn_max
        if q % cand == 0 and cand * 128 <= tn_max:
            d = cand
    tn = d * 128
    grid_j = out_p // tn

    # ---- wrapper-side one-time layout plumbing (small-row batch pad + tiny factors) ----
    if B_p != B:
        x1 = jnp.pad(x1, ((0, B_p - B), (0, 0)))      # few zero rows; sliced off below
        x2 = jnp.pad(x2, ((0, B_p - B), (0, 0)))

    f0t = jnp.pad(f0.T, ((0, 0), (0, out_p - out_features)))        # (R, out_p)
    if bias is None:
        bias2d = jnp.zeros((1, out_p), jnp.float32)
    else:
        bias2d = jnp.pad(bias.reshape(1, out_features).astype(jnp.float32),
                         ((0, 0), (0, out_p - out_features)))

    x_pipe = {} if input_buffers == 2 else {"pipeline_mode": pl.Buffered(input_buffers)}

    cp_kwargs = dict(dimension_semantics=("parallel", "parallel"))
    if vmem_limit_bytes is not None:
        cp_kwargs["vmem_limit_bytes"] = vmem_limit_bytes

    out_padded = pl.pallas_call(
        _cp_bilinear_kernel,
        out_shape=jax.ShapeDtypeStruct((B_p, out_p), out_dtype),
        grid_spec=pltpu.PrefetchScalarGridSpec(
            num_scalar_prefetch=0,
            grid=(n_b, grid_j),
            in_specs=[
                pl.BlockSpec((tb, in1), lambda i, j: (i, 0), **x_pipe),   # x1 tile
                pl.BlockSpec((tb, in2), lambda i, j: (i, 0), **x_pipe),   # x2 tile
                pl.BlockSpec((in1, order), lambda i, j: (0, 0)),          # F1 (resident)
                pl.BlockSpec((in2, order), lambda i, j: (0, 0)),          # F2 (resident)
                pl.BlockSpec((order, tn), lambda i, j: (0, j)),           # F0^T slice
                pl.BlockSpec((1, tn), lambda i, j: (0, j)),               # bias slice
            ],
            out_specs=pl.BlockSpec((tb, tn), lambda i, j: (i, j)),
        ),
        compiler_params=pltpu.CompilerParams(**cp_kwargs),
    )(x1, x2, f1, f2, f0t, bias2d)

    return out_padded[:B, :out_features]


def _reference(x1, x2, f0, f1, f2, bias):
    # Materialize W exactly like _cpcores_to_tensor, then F.bilinear semantics.
    W = jnp.einsum("or,ir,jr->oij", f0, f1, f2)
    out = jnp.einsum("bi,oij,bj->bo", x1, W, x2)
    if bias is not None:
        out = out + bias[None, :]
    return out


if __name__ == "__main__":
    # Module hyperparameters (small, consistent with the forward pass).
    in1_features, in2_features, out_features, order = 32, 24, 64, 8
    batch = 16

    key = jax.random.PRNGKey(0)
    k1, k2, k3, k4, k5 = jax.random.split(key, 5)

    # Parameter init matching reset_parameters(): normal(0, CONST) per factor, zero bias.
    CONST = (0.05 / order ** 0.5) ** (1.0 / 3.0)
    f0 = CONST * jax.random.normal(k1, (out_features, order), jnp.float32)
    f1 = CONST * jax.random.normal(k2, (in1_features, order), jnp.float32)
    f2 = CONST * jax.random.normal(k3, (in2_features, order), jnp.float32)
    bias = jnp.zeros((out_features,), jnp.float32)

    x1 = jax.random.normal(k4, (batch, in1_features), jnp.float32)
    x2 = jax.random.normal(k5, (batch, in2_features), jnp.float32)

    out = cp_bilinear(x1, x2, f0, f1, f2, bias)
    out = jax.block_until_ready(out)

    ref = _reference(x1, x2, f0, f1, f2, bias)
    np.testing.assert_allclose(np.asarray(out), np.asarray(ref), rtol=1e-4, atol=1e-5)

    print("KERNEL_OK")
</pallas_src>

<mosaic_0001>
module attributes {stable_mosaic.version = 11 : i64} {
  func.func @_cp_bilinear_kernel(%arg0: i32, %arg1: i32, %arg2: memref<8x32xf32, #tpu.memory_space<vmem>>, %arg3: memref<8x24xf32, #tpu.memory_space<vmem>>, %arg4: memref<32x8xf32, #tpu.memory_space<vmem>>, %arg5: memref<24x8xf32, #tpu.memory_space<vmem>>, %arg6: memref<8x128xf32, #tpu.memory_space<vmem>>, %arg7: memref<1x128xf32, #tpu.memory_space<vmem>>, %arg8: memref<8x128xf32, #tpu.memory_space<vmem>>) attributes {dimension_semantics = [#tpu.dimension_semantics<parallel>, #tpu.dimension_semantics<parallel>], iteration_bounds = array<i64: 2, 1>, scalar_prefetch = 0 : i64, scratch_operands = 0 : i64, tpu.core_type = #tpu.core_type<tc>, window_params = [{transform_indices = @transform_0, window_bounds = array<i64: 8, 32>}, {transform_indices = @transform_1, window_bounds = array<i64: 8, 24>}, {pipeline_mode = #tpu.pipeline_mode<synchronous>, transform_indices = @transform_2, window_bounds = array<i64: 32, 8>}, {pipeline_mode = #tpu.pipeline_mode<synchronous>, transform_indices = @transform_3, window_bounds = array<i64: 24, 8>}, {transform_indices = @transform_4, window_bounds = array<i64: 8, 128>}, {transform_indices = @transform_5, window_bounds = array<i64: 1, 128>}, {transform_indices = @transform_6, window_bounds = array<i64: 8, 128>}]} {
    %c0 = arith.constant 0 : index
    %c0_0 = arith.constant 0 : index
    %0 = vector.load %arg2[%c0, %c0_0] : memref<8x32xf32, #tpu.memory_space<vmem>>, vector<8x32xf32>
    %c0_1 = arith.constant 0 : index
    %c0_2 = arith.constant 0 : index
    %1 = vector.load %arg4[%c0_1, %c0_2] : memref<32x8xf32, #tpu.memory_space<vmem>>, vector<32x8xf32>
    %cst = arith.constant dense<0.000000e+00> : vector<8x8xf32>
    %2 = tpu.matmul %0, %1, %cst {dimension_numbers = #tpu.dot_dimension_numbers<[1], [0], [0], [1], [0, 0, 1, 1], [], []>} : vector<8x32xf32>, vector<32x8xf32>, vector<8x8xf32> -> vector<8x8xf32>
    %c0_3 = arith.constant 0 : index
    %c0_4 = arith.constant 0 : index
    %3 = vector.load %arg3[%c0_3, %c0_4] : memref<8x24xf32, #tpu.memory_space<vmem>>, vector<8x24xf32>
    %c0_5 = arith.constant 0 : index
    %c0_6 = arith.constant 0 : index
    %4 = vector.load %arg5[%c0_5, %c0_6] : memref<24x8xf32, #tpu.memory_space<vmem>>, vector<24x8xf32>
    %cst_7 = arith.constant dense<0.000000e+00> : vector<8x8xf32>
    %5 = tpu.matmul %3, %4, %cst_7 {dimension_numbers = #tpu.dot_dimension_numbers<[1], [0], [0], [1], [0, 0, 1, 1], [], []>} : vector<8x24xf32>, vector<24x8xf32>, vector<8x8xf32> -> vector<8x8xf32>
    %6 = arith.mulf %2, %5 : vector<8x8xf32>
    %c0_8 = arith.constant 0 : index
    %c0_9 = arith.constant 0 : index
    %7 = vector.load %arg6[%c0_8, %c0_9] : memref<8x128xf32, #tpu.memory_space<vmem>>, vector<8x128xf32>
    %cst_10 = arith.constant dense<0.000000e+00> : vector<8x128xf32>
    %8 = tpu.matmul %6, %7, %cst_10 {dimension_numbers = #tpu.dot_dimension_numbers<[1], [0], [0], [1], [0, 0, 1, 1], [], []>} : vector<8x8xf32>, vector<8x128xf32>, vector<8x128xf32> -> vector<8x128xf32>
    %c0_11 = arith.constant 0 : index
    %c0_12 = arith.constant 0 : index
    %9 = vector.load %arg7[%c0_11, %c0_12] : memref<1x128xf32, #tpu.memory_space<vmem>>, vector<1x128xf32>
    %10 = vector.broadcast %9 : vector<1x128xf32> to vector<8x128xf32>
    %11 = arith.addf %8, %10 : vector<8x128xf32>
    %c0_13 = arith.constant 0 : index
    %c0_14 = arith.constant 0 : index
    %12 = vector.load %arg8[%c0_13, %c0_14] : memref<8x128xf32, #tpu.memory_space<vmem>>, vector<8x128xf32>
    tpu.vector_store %arg8[%c0_13, %c0_14], %11 {strides = array<i32>} : memref<8x128xf32, #tpu.memory_space<vmem>>, vector<8x128xf32>,
    return
  }
  func.func @transform_0(%arg0: i32, %arg1: i32) -> (i32, i32) {
    %c0_i32 = arith.constant 0 : i32
    %c0_i32_0 = arith.constant 0 : i32
    return %arg0, %c0_i32 : i32, i32
  }
  func.func @transform_1(%arg0: i32, %arg1: i32) -> (i32, i32) {
    %c0_i32 = arith.constant 0 : i32
    %c0_i32_0 = arith.constant 0 : i32
    return %arg0, %c0_i32 : i32, i32
  }
  func.func @transform_2(%arg0: i32, %arg1: i32) -> (i32, i32) {
    %c0_i32 = arith.constant 0 : i32
    %c0_i32_0 = arith.constant 0 : i32
    %c0_i32_1 = arith.constant 0 : i32
    return %c0_i32, %c0_i32_0 : i32, i32
  }
  func.func @transform_3(%arg0: i32, %arg1: i32) -> (i32, i32) {
    %c0_i32 = arith.constant 0 : i32
    %c0_i32_0 = arith.constant 0 : i32
    %c0_i32_1 = arith.constant 0 : i32
    return %c0_i32, %c0_i32_0 : i32, i32
  }
  func.func @transform_4(%arg0: i32, %arg1: i32) -> (i32, i32) {
    %c0_i32 = arith.constant 0 : i32
    %c0_i32_0 = arith.constant 0 : i32
    return %c0_i32, %arg1 : i32, i32
  }
  func.func @transform_5(%arg0: i32, %arg1: i32) -> (i32, i32) {
    %c0_i32 = arith.constant 0 : i32
    %c0_i32_0 = arith.constant 0 : i32
    return %c0_i32, %arg1 : i32, i32
  }
  func.func @transform_6(%arg0: i32, %arg1: i32) -> (i32, i32) {
    %c0_i32 = arith.constant 0 : i32
    return %arg0, %arg1 : i32, i32
  }
}

</mosaic_0001>

<llo_original>
// kernel: cp_bilinear.1
$region0: #{cp_bilinear.1}
  #allocation0 [shape = 'u32[]', space=smem, size = 0x4, offset = 0x4, fixed_abs, tag = 'smem constant byte address 0x4 - core index']
  #allocation1 [shape = 'u32[144,128]{1,0:T(1,128)}', space=vmem, size = 0x12000, scoped, tag = 'internal scratch']
  %s0 = inlined_call_operand.vmem [shape: f32[16,32], index: 0, kind: input, shape index: {}]
  %s1 = inlined_call_operand.vmem [shape: f32[16,24], index: 1, kind: input, shape index: {}]
  %s2 = inlined_call_operand.vmem [shape: f32[32,8], index: 2, kind: input, shape index: {}]
  %s3 = inlined_call_operand.vmem [shape: f32[24,8], index: 3, kind: input, shape index: {}]
  %s4 = inlined_call_operand.vmem [shape: f32[8,128], index: 4, kind: input, shape index: {}]
  %s5 = inlined_call_operand.vmem [shape: f32[1,128], index: 5, kind: input, shape index: {}]
  %s6 = inlined_call_operand.hbm [shape: f32[16,128], index: 6, kind: output, shape index: {}]
  %s7 = sld [smem:[#allocation0]]
  $region57: #{cp_bilinear.1} parent=0
    _
  %s9 = ssub.s32 1, %s7
  %s10 = scalar_select 0, %s9, %s7
  $region1: #{cp_bilinear.1} parent=0
    #allocation2 [shape = 'u8[8192]{0}', space=vmem, size = 0x2000, scoped, tag = 'output window, operand 0']
    #allocation3 [shape = 's32[2]{0}', space=sflag, size = 0x8, scoped, tag = 'scoped memory for cp_bilinear.1']
    %11 = vsyncpa [#allocation3], 0
    %s12 = scalar_lea.sflag [#allocation3], 1
    %13 = vsyncpa %s12, 0
    loop: start=0, step=1, limit=4
    $region2: #{cp_bilinear.1} parent=1 // loop_pre_header
      _
    $region3: #{cp_bilinear.1} parent=1 // loop_header
      %s15 = sphi 0, %s19
      %p16 = scmp.ge.s32.totalorder %s15, 4
      %s22 = sphi 0, %s34
      %s23 = sphi 0, %s30
      %s24 = sphi 0, %s22
      %s25 = sphi 0, %s23
      %s26 = sphi 0, %s24
      %s27 = sphi 0, %s25
      %s37 = sphi 0, %s39
      %s40 = sphi 0, %s37
      %s41 = sphi 0, %s40
      %s57 = sphi 0, %s41
      %s63 = sphi 0, %s65
      %s66 = sphi 0, %s63
      %s67 = sphi 0, %s66
      %s83 = sphi 0, %s67
      %s87 = sphi 0, %s87
      %s89 = sphi 0, %s87
      %s90 = sphi 0, %s89
      %s104 = sphi 0, %s90
      %s108 = sphi 0, %s108
      %s110 = sphi 0, %s108
      %s111 = sphi 0, %s110
      %s125 = sphi 0, %s111
      %s131 = sphi 0, %s133
      %s134 = sphi 0, %s131
      %s135 = sphi 0, %s134
      %s151 = sphi 0, %s135
      %s157 = sphi 0, %s159
      %s160 = sphi 0, %s157
      %s161 = sphi 0, %s160
      %s177 = sphi 0, %s161
      %s185 = sphi 0, %s187
      %s188 = sphi 0, %s185
      %s189 = sphi 0, %s188
      %s205 = sphi 0, %s189
    $region4: #{cp_bilinear.1} parent=1 // loop_header_branch
      %18 = sbr.rel (%p16) target = $region8
    $region5: #{cp_bilinear.1} parent=1 // loop_body
      %s20 = ssub.s32 %s15, 1
      %s21 = ssub.s32 %s15, 2
      %s28 = sadd.s32 1, %s23
      %p29 = scmp.ge.s32.totalorder %s28, 1
      %s30 = scalar_select %p29, 0, %s28
      %s31 = sadd.s32 1, %s22
      %s32 = scalar_select %p29, %s31, %s22
      %p33 = scmp.ge.s32.totalorder %s32, 2
      %s34 = scalar_select %p33, 0, %s32
      %s35 = ssub.s32 %s22, %s34
      %p36 = scmp.eq.s32.totalorder %s35, 0
      %s38 = sadd.s32 %s37, 1
      %s39 = scalar_select %p36, %s37, %s38
      %p42 = pneg %p36
      %p43 = scmp.eq.s32.totalorder %s15, 1
      %p44 = por %p42, %p43
      %p45 = scmp.ne.s32.totalorder %s37, %s40
      %p46 = scmp.eq.s32.totalorder %s15, 0
      %p47 = por %p45, %p46
      %p48 = scmp.ne.s32.totalorder %s37, %s40
      %p49 = scmp.eq.s32.totalorder %s20, 1
      %p50 = por %p48, %p49
      %p51 = scmp.ne.s32.totalorder %s40, %s41
      %p52 = scmp.eq.s32.totalorder %s20, 0
      %p53 = por %p51, %p52
      %p54 = scmp.ne.s32.totalorder %s40, %s41
      %p55 = scmp.eq.s32.totalorder %s21, 1
      %p56 = por %p54, %p55
      %p58 = scmp.ne.s32.totalorder %s41, %s57
      %p59 = scmp.eq.s32.totalorder %s21, 0
      %p60 = por %p58, %p59
      %s61 = ssub.s32 %s22, %s34
      %p62 = scmp.eq.s32.totalorder %s61, 0
      %s64 = sadd.s32 %s63, 1
      %s65 = scalar_select %p62, %s63, %s64
      %p68 = pneg %p62
      %p69 = scmp.eq.s32.totalorder %s15, 1
      %p70 = por %p68, %p69
      %p71 = scmp.ne.s32.totalorder %s63, %s66
      %p72 = scmp.eq.s32.totalorder %s15, 0
      %p73 = por %p71, %p72
      %p74 = scmp.ne.s32.totalorder %s63, %s66
      %p75 = scmp.eq.s32.totalorder %s20, 1
      %p76 = por %p74, %p75
      %p77 = scmp.ne.s32.totalorder %s66, %s67
      %p78 = scmp.eq.s32.totalorder %s20, 0
      %p79 = por %p77, %p78
      %p80 = scmp.ne.s32.totalorder %s66, %s67
      %p81 = scmp.eq.s32.totalorder %s21, 1
      %p82 = por %p80, %p81
      %p84 = scmp.ne.s32.totalorder %s67, %s83
      %p85 = scmp.eq.s32.totalorder %s21, 0
      %p86 = por %p84, %p85
      %s88 = sadd.s32 %s87, 1
      %p91 = scmp.eq.s32.totalorder %s15, 1
      %p92 = scmp.ne.s32.totalorder %s87, %s89
      %p93 = scmp.eq.s32.totalorder %s15, 0
      %p94 = por %p92, %p93
      %p95 = scmp.ne.s32.totalorder %s87, %s89
      %p96 = scmp.eq.s32.totalorder %s20, 1
      %p97 = por %p95, %p96
      %p98 = scmp.ne.s32.totalorder %s89, %s90
      %p99 = scmp.eq.s32.totalorder %s20, 0
      %p100 = por %p98, %p99
      %p101 = scmp.ne.s32.totalorder %s89, %s90
      %p102 = scmp.eq.s32.totalorder %s21, 1
      %p103 = por %p101, %p102
      %p105 = scmp.ne.s32.totalorder %s90, %s104
      %p106 = scmp.eq.s32.totalorder %s21, 0
      %p107 = por %p105, %p106
      %s109 = sadd.s32 %s108, 1
      %p112 = scmp.eq.s32.totalorder %s15, 1
      %p113 = scmp.ne.s32.totalorder %s108, %s110
      %p114 = scmp.eq.s32.totalorder %s15, 0
      %p115 = por %p113, %p114
      %p116 = scmp.ne.s32.totalorder %s108, %s110
      %p117 = scmp.eq.s32.totalorder %s20, 1
      %p118 = por %p116, %p117
      %p119 = scmp.ne.s32.totalorder %s110, %s111
      %p120 = scmp.eq.s32.totalorder %s20, 0
      %p121 = por %p119, %p120
      %p122 = scmp.ne.s32.totalorder %s110, %s111
      %p123 = scmp.eq.s32.totalorder %s21, 1
      %p124 = por %p122, %p123
      %p126 = scmp.ne.s32.totalorder %s111, %s125
      %p127 = scmp.eq.s32.totalorder %s21, 0
      %p128 = por %p126, %p127
      %s129 = ssub.s32 %s23, %s30
      %p130 = scmp.eq.s32.totalorder %s129, 0
      %s132 = sadd.s32 %s131, 1
      %s133 = scalar_select %p130, %s131, %s132
      %p136 = pneg %p130
      %p137 = scmp.eq.s32.totalorder %s15, 1
      %p138 = por %p136, %p137
      %p139 = scmp.ne.s32.totalorder %s131, %s134
      %p140 = scmp.eq.s32.totalorder %s15, 0
      %p141 = por %p139, %p140
      %p142 = scmp.ne.s32.totalorder %s131, %s134
      %p143 = scmp.eq.s32.totalorder %s20, 1
      %p144 = por %p142, %p143
      %p145 = scmp.ne.s32.totalorder %s134, %s135
      %p146 = scmp.eq.s32.totalorder %s20, 0
      %p147 = por %p145, %p146
      %p148 = scmp.ne.s32.totalorder %s134, %s135
      %p149 = scmp.eq.s32.totalorder %s21, 1
      %p150 = por %p148, %p149
      %p152 = scmp.ne.s32.totalorder %s135, %s151
      %p153 = scmp.eq.s32.totalorder %s21, 0
      %p154 = por %p152, %p153
      %s155 = ssub.s32 %s23, %s30
      %p156 = scmp.eq.s32.totalorder %s155, 0
      %s158 = sadd.s32 %s157, 1
      %s159 = scalar_select %p156, %s157, %s158
      %p162 = pneg %p156
      %p163 = scmp.eq.s32.totalorder %s15, 1
      %p164 = por %p162, %p163
      %p165 = scmp.ne.s32.totalorder %s157, %s160
      %p166 = scmp.eq.s32.totalorder %s15, 0
      %p167 = por %p165, %p166
      %p168 = scmp.ne.s32.totalorder %s157, %s160
      %p169 = scmp.eq.s32.totalorder %s20, 1
      %p170 = por %p168, %p169
      %p171 = scmp.ne.s32.totalorder %s160, %s161
      %p172 = scmp.eq.s32.totalorder %s20, 0
      %p173 = por %p171, %p172
      %p174 = scmp.ne.s32.totalorder %s160, %s161
      %p175 = scmp.eq.s32.totalorder %s21, 1
      %p176 = por %p174, %p175
      %p178 = scmp.ne.s32.totalorder %s161, %s177
      %p179 = scmp.eq.s32.totalorder %s21, 0
      %p180 = por %p178, %p179
      %s181 = ssub.s32 %s22, %s34
      %s182 = ssub.s32 %s23, %s30
      %s183 = sor.u32 %s181, %s182
      %p184 = scmp.eq.s32.totalorder %s183, 0
      %s186 = sadd.s32 %s185, 1
      %s187 = scalar_select %p184, %s185, %s186
      %p190 = pneg %p184
      %p191 = scmp.eq.s32.totalorder %s15, 1
      %p192 = por %p190, %p191
      %p193 = scmp.ne.s32.totalorder %s185, %s188
      %p194 = scmp.eq.s32.totalorder %s15, 0
      %p195 = por %p193, %p194
      %p196 = scmp.ne.s32.totalorder %s185, %s188
      %p197 = scmp.eq.s32.totalorder %s20, 1
      %p198 = por %p196, %p197
      %p199 = scmp.ne.s32.totalorder %s188, %s189
      %p200 = scmp.eq.s32.totalorder %s20, 0
      %p201 = por %p199, %p200
      %p202 = scmp.ne.s32.totalorder %s188, %s189
      %p203 = scmp.eq.s32.totalorder %s21, 1
      %p204 = por %p202, %p203
      %p206 = scmp.ne.s32.totalorder %s189, %s205
      %p207 = scmp.eq.s32.totalorder %s21, 0
      %p208 = por %p206, %p207
      %p209 = scmp.le.s32.totalorder 1, %s15
      %p210 = scmp.lt.s32.totalorder %s15, 3
      %p211 = pnand %p209, %p210
      %p212 = pneg %p211
      // Predicated region
      $region9: #{cp_bilinear.1} parent=5 // pred_check
        _
      $region10: #{cp_bilinear.1} parent=5 // pred_check_branch
        %214 = sbr.rel (%p211) target = $region12
      $region11: #{cp_bilinear.1} parent=5 // pred_region
        %s215 = ssub.s32 %s15, 1
        // Predicated region
        $region13: #{cp_bilinear.1} parent=11 // pred_check
          %p216 = pneg %p100
        $region14: #{cp_bilinear.1} parent=11 // pred_check_branch
          %218 = sbr.rel (%p216) target = $region16
        $region15: #{cp_bilinear.1} parent=11 // pred_region
          _
        $region16: #{cp_bilinear.1} parent=11 // pred_fallthru
          _
        // Predicated region
        $region17: #{cp_bilinear.1} parent=11 // pred_check
          %p219 = pneg %p121
        $region18: #{cp_bilinear.1} parent=11 // pred_check_branch
          %221 = sbr.rel (%p219) target = $region20
        $region19: #{cp_bilinear.1} parent=11 // pred_region
          _
        $region20: #{cp_bilinear.1} parent=11 // pred_fallthru
          _
        // Predicated region
        $region21: #{cp_bilinear.1} parent=11 // pred_check
          %p222 = pneg %p147
        $region22: #{cp_bilinear.1} parent=11 // pred_check_branch
          %224 = sbr.rel (%p222) target = $region24
        $region23: #{cp_bilinear.1} parent=11 // pred_region
          %p225 = scmp.lt.s32.totalorder %s25, 0
          %s226 = scalar_select %p225, %s25, 0
          %s227 = smul.addr %s226, 8
          %s228 = scalar_lea.vmem %s4, %s227
        $region24: #{cp_bilinear.1} parent=11 // pred_fallthru
          _
        // Predicated region
        $region25: #{cp_bilinear.1} parent=11 // pred_check
          %p229 = pneg %p173
        $region26: #{cp_bilinear.1} parent=11 // pred_check_branch
          %231 = sbr.rel (%p229) target = $region28
        $region27: #{cp_bilinear.1} parent=11 // pred_region
          %p232 = scmp.lt.s32.totalorder %s25, 0
          %s233 = scalar_select %p232, %s25, 0
          %s234 = scalar_lea.vmem %s5, %s233
        $region28: #{cp_bilinear.1} parent=11 // pred_fallthru
          _
      $region12: #{cp_bilinear.1} parent=5 // pred_fallthru
        _
      %p235 = scmp.lt.s32.totalorder %s15, 2
      // Predicated region
      $region29: #{cp_bilinear.1} parent=5 // pred_check
        %p236 = pneg %p235
      $region30: #{cp_bilinear.1} parent=5 // pred_check_branch
        %238 = sbr.rel (%p236) target = $region32
      $region31: #{cp_bilinear.1} parent=5 // pred_region
        // Predicated region
        $region33: #{cp_bilinear.1} parent=31 // pred_check
          %p239 = pneg %p47
        $region34: #{cp_bilinear.1} parent=31 // pred_check_branch
          %241 = sbr.rel (%p239) target = $region36
        $region35: #{cp_bilinear.1} parent=31 // pred_region
          %p242 = scmp.lt.s32.totalorder %s22, 1
          %s243 = scalar_select %p242, %s22, 1
          %s244 = smul.addr %s243, 8
          %s245 = scalar_lea.vmem %s0, %s244
        $region36: #{cp_bilinear.1} parent=31 // pred_fallthru
          _
        // Predicated region
        $region37: #{cp_bilinear.1} parent=31 // pred_check
          %p246 = pneg %p73
        $region38: #{cp_bilinear.1} parent=31 // pred_check_branch
          %248 = sbr.rel (%p246) target = $region40
        $region39: #{cp_bilinear.1} parent=31 // pred_region
          %p249 = scmp.lt.s32.totalorder %s22, 1
          %s250 = scalar_select %p249, %s22, 1
          %s251 = smul.addr %s250, 8
          %s252 = scalar_lea.vmem %s1, %s251
        $region40: #{cp_bilinear.1} parent=31 // pred_fallthru
          _
      $region32: #{cp_bilinear.1} parent=5 // pred_fallthru
        _
      %p253 = scmp.le.s32.totalorder 1, %s15
      %p254 = scmp.lt.s32.totalorder %s15, 3
      %p255 = pnand %p253, %p254
      %p256 = pneg %p255
      // Predicated region
      $region41: #{cp_bilinear.1} parent=5 // pred_check
        _
      $region42: #{cp_bilinear.1} parent=5 // pred_check_branch
        %258 = sbr.rel (%p255) target = $region44
      $region43: #{cp_bilinear.1} parent=5 // pred_region
        %s259 = ssub.s32 %s15, 1
        %p260 = scmp.lt.s32.totalorder %s24, 1
        %s261 = scalar_select %p260, %s24, 1
        %s262 = smul.addr %s261, 8
        %s263 = scalar_lea.vmem %s0, %s262
        %p264 = pneg %p53
        %p265 = pneg %p50
        %p266 = scmp.lt.s32.totalorder %s24, 1
        %s267 = scalar_select %p266, %s24, 1
        %s268 = smul.addr %s267, 8
        %s269 = scalar_lea.vmem %s1, %s268
        %p270 = pneg %p79
        %p271 = pneg %p76
        %p272 = pneg %p100
        %p273 = pneg %p97
        %p274 = pneg %p121
        %p275 = pneg %p118
        %p276 = scmp.lt.s32.totalorder %s25, 0
        %s277 = scalar_select %p276, %s25, 0
        %s278 = smul.addr %s277, 8
        %s279 = scalar_lea.vmem %s4, %s278
        %p280 = pneg %p147
        %p281 = pneg %p144
        %p282 = scmp.lt.s32.totalorder %s25, 0
        %s283 = scalar_select %p282, %s25, 0
        %s284 = scalar_lea.vmem %s5, %s283
        %p285 = pneg %p173
        %p286 = pneg %p170
        %p287 = pneg %p201
        %p288 = pneg %p198
        %s289 = sand.u32 %s188, 1
        %s290 = scalar_lea.sflag [#allocation3], %s289
        %s291 = sand.u32 %s188, 1
        %s292 = smul.addr %s291, 8
        %s293 = scalar_lea.vmem [#allocation2], %s292
        %p294 = scmp.lt.s32.totalorder %s24, 1
        %s295 = scalar_select %p294, %s24, 1
        %s296 = smul.addr %s295, 8
        %s297 = scalar_lea.vmem %s0, %s296
        %p298 = scmp.lt.s32.totalorder %s24, 1
        %s299 = scalar_select %p298, %s24, 1
        %s300 = smul.addr %s299, 8
        %s301 = scalar_lea.vmem %s1, %s300
        %p302 = scmp.lt.s32.totalorder %s25, 0
        %s303 = scalar_select %p302, %s25, 0
        %s304 = smul.addr %s303, 8
        %s305 = scalar_lea.vmem %s4, %s304
        %p306 = scmp.lt.s32.totalorder %s25, 0
        %s307 = scalar_select %p306, %s25, 0
        %s308 = scalar_lea.vmem %s5, %s307
        %v309 = vld [vmem:[%s297] sm:$0xff]
        %v310 = vld [vmem:[%s2] sm:$0xff]
        %v311 = vld [vmem:[%s2 + $0x8] sm:$0xff]
        %v312 = vld [vmem:[%s2 + $0x10] sm:$0xff]
        %v313 = vld [vmem:[%s2 + $0x18] sm:$0xff]
        %vm314 = vcmask 261120
        %v316 = vsel %vm314, %v309, 0
        %318 = vmatprep.subr.mxu0 0.0
        %319 = vmatpush1.msra.mxu0 0.0
        %320 = vmatprep.subr.mxu0 0.0
        %321 = vmatpush1.msra.mxu0 0.0
        %322 = vmatprep.subr.mxu0 0.0
        %323 = vmatpush1.msra.mxu0 0.0
        %324 = vmatprep.subr.mxu0 0.0
        %325 = vmatpush1.msra.mxu0 0.0
        %326 = vmatprep.subr.mxu0 0.0
        %327 = vmatpush1.msra.mxu0 0.0
        %328 = vmatprep.subr.mxu0 0.0
        %329 = vmatpush1.msra.mxu0 0.0
        %330 = vmatprep.subr.mxu0 0.0
        %331 = vmatpush1.msra.mxu0 0.0
        %332 = vmatprep.subr.mxu0 0.0
        %333 = vmatpush1.msra.mxu0 0.0
        %334 = vmatprep.subr.mxu0 0.0
        %335 = vmatpush1.msra.mxu0 0.0
        %336 = vmatprep.subr.mxu0 0.0
        %337 = vmatpush1.msra.mxu0 0.0
        %338 = vmatprep.subr.mxu0 0.0
        %339 = vmatpush1.msra.mxu0 0.0
        %340 = vmatprep.subr.mxu0 0.0
        %341 = vmatpush1.msra.mxu0 0.0
        %342 = vmatprep.subr.mxu0 0.0
        %343 = vmatpush1.msra.mxu0 %v313
        %344 = vmatprep.subr.mxu0 0.0
        %345 = vmatpush1.msra.mxu0 %v312
        %346 = vmatprep.subr.mxu0 0.0
        %347 = vmatpush1.msra.mxu0 %v311
        %348 = vmatprep.subr.mxu0 0.0
        %349 = vmatpush1.msra.mxu0 %v310
        %350 = vmatprep.subr.mxu0 0.0
        %351 = vmatpush2.msra.mxu0 0.0
        %352 = vmatprep.subr.mxu0 0.0
        %353 = vmatpush2.msra.mxu0 0.0
        %354 = vmatprep.subr.mxu0 0.0
        %355 = vmatpush2.msra.mxu0 0.0
        %356 = vmatprep.subr.mxu0 0.0
        %357 = vmatpush2.msra.mxu0 0.0
        %358 = vmatprep.subr.mxu0 0.0
        %359 = vmatpush2.msra.mxu0 0.0
        %360 = vmatprep.subr.mxu0 0.0
        %361 = vmatpush2.msra.mxu0 0.0
        %362 = vmatprep.subr.mxu0 0.0
        %363 = vmatpush2.msra.mxu0 0.0
        %364 = vmatprep.subr.mxu0 0.0
        %365 = vmatpush2.msra.mxu0 0.0
        %366 = vmatprep.subr.mxu0 0.0
        %367 = vmatpush2.msra.mxu0 0.0
        %368 = vmatprep.subr.mxu0 0.0
        %369 = vmatpush2.msra.mxu0 0.0
        %370 = vmatprep.subr.mxu0 0.0
        %371 = vmatpush2.msra.mxu0 0.0
        %372 = vmatprep.subr.mxu0 0.0
        %373 = vmatpush2.msra.mxu0 0.0
        %374 = vmatprep.subr.mxu0 0.0
        %375 = vmatpush2.msra.mxu0 0.0
        %376 = vmatprep.subr.mxu0 0.0
        %377 = vmatpush2.msra.mxu0 0.0
        %378 = vmatprep.subr.mxu0 0.0
        %379 = vmatpush2.msra.mxu0 0.0
        %380 = vmatprep.subr.mxu0 0.0
        %381 = vmatpush2.msra.mxu0 0.0
        %382 = vmatprep.mubr.f32.mxu0 0.0
        %383 = vmatmul.mubr.f32.gmra.mxu0 %v316
        %v384 = vpop.f32.mrf.mxu0
        %v385 = vadd.f32 0.0, %v384
        %v386 = vpop.f32.mrf.mxu0
        %387 = vdwg.mxu0
        %v388 = vld [vmem:[%s301] sm:$0xff]
        %v389 = vld [vmem:[%s3] sm:$0xff]
        %v390 = vld [vmem:[%s3 + $0x8] sm:$0xff]
        %v391 = vld [vmem:[%s3 + $0x10] sm:$0xff]
        %vm392 = vcmask 195584
        %v394 = vsel %vm392, %v388, 0
        %396 = vmatprep.subr.mxu0 0.0
        %397 = vmatpush1.msra.mxu0 0.0
        %398 = vmatprep.subr.mxu0 0.0
        %399 = vmatpush1.msra.mxu0 0.0
        %400 = vmatprep.subr.mxu0 0.0
        %401 = vmatpush1.msra.mxu0 0.0
        %402 = vmatprep.subr.mxu0 0.0
        %403 = vmatpush1.msra.mxu0 0.0
        %404 = vmatprep.subr.mxu0 0.0
        %405 = vmatpush1.msra.mxu0 0.0
        %406 = vmatprep.subr.mxu0 0.0
        %407 = vmatpush1.msra.mxu0 0.0
        %408 = vmatprep.subr.mxu0 0.0
        %409 = vmatpush1.msra.mxu0 0.0
        %410 = vmatprep.subr.mxu0 0.0
        %411 = vmatpush1.msra.mxu0 0.0
        %412 = vmatprep.subr.mxu0 0.0
        %413 = vmatpush1.msra.mxu0 0.0
        %414 = vmatprep.subr.mxu0 0.0
        %415 = vmatpush1.msra.mxu0 0.0
        %416 = vmatprep.subr.mxu0 0.0
        %417 = vmatpush1.msra.mxu0 0.0
        %418 = vmatprep.subr.mxu0 0.0
        %419 = vmatpush1.msra.mxu0 0.0
        %420 = vmatprep.subr.mxu0 0.0
        %421 = vmatpush1.msra.mxu0 0.0
        %422 = vmatprep.subr.mxu0 0.0
        %423 = vmatpush1.msra.mxu0 %v391
        %424 = vmatprep.subr.mxu0 0.0
        %425 = vmatpush1.msra.mxu0 %v390
        %426 = vmatprep.subr.mxu0 0.0
        %427 = vmatpush1.msra.mxu0 %v389
        %428 = vmatprep.subr.mxu0 0.0
        %429 = vmatpush2.msra.mxu0 0.0
        %430 = vmatprep.subr.mxu0 0.0
        %431 = vmatpush2.msra.mxu0 0.0
        %432 = vmatprep.subr.mxu0 0.0
        %433 = vmatpush2.msra.mxu0 0.0
        %434 = vmatprep.subr.mxu0 0.0
        %435 = vmatpush2.msra.mxu0 0.0
        %436 = vmatprep.subr.mxu0 0.0
        %437 = vmatpush2.msra.mxu0 0.0
        %438 = vmatprep.subr.mxu0 0.0
        %439 = vmatpush2.msra.mxu0 0.0
        %440 = vmatprep.subr.mxu0 0.0
        %441 = vmatpush2.msra.mxu0 0.0
        %442 = vmatprep.subr.mxu0 0.0
        %443 = vmatpush2.msra.mxu0 0.0
        %444 = vmatprep.subr.mxu0 0.0
        %445 = vmatpush2.msra.mxu0 0.0
        %446 = vmatprep.subr.mxu0 0.0
        %447 = vmatpush2.msra.mxu0 0.0
        %448 = vmatprep.subr.mxu0 0.0
        %449 = vmatpush2.msra.mxu0 0.0
        %450 = vmatprep.subr.mxu0 0.0
        %451 = vmatpush2.msra.mxu0 0.0
        %452 = vmatprep.subr.mxu0 0.0
        %453 = vmatpush2.msra.mxu0 0.0
        %454 = vmatprep.subr.mxu0 0.0
        %455 = vmatpush2.msra.mxu0 0.0
        %456 = vmatprep.subr.mxu0 0.0
        %457 = vmatpush2.msra.mxu0 0.0
        %458 = vmatprep.subr.mxu0 0.0
        %459 = vmatpush2.msra.mxu0 0.0
        %460 = vmatprep.mubr.f32.mxu0 0.0
        %461 = vmatmul.mubr.f32.gmra.mxu0 %v394
        %v462 = vpop.f32.mrf.mxu0
        %v463 = vadd.f32 0.0, %v462
        %v464 = vpop.f32.mrf.mxu0
        %465 = vdwg.mxu0
        %v466 = vmul.f32 %v385, %v463
        %v467 = vld [vmem:[%s305] sm:$0xff]
        %v468 = vld [vmem:[%s308] sm:$0x1]
        %v470 = vlaneseq
        %v471 = vshrl.u32 %v470, 7
        %v472 = vsub.s32 0, %v471
        %v473 = vrot.slane %v468, %v472
        %vm475 = vcmask 64512
        %v477 = vsel %vm475, %v466, 0
        %479 = vmatprep.subr.mxu0 0.0
        %480 = vmatpush1.msra.mxu0 0.0
        %481 = vmatprep.subr.mxu0 0.0
        %482 = vmatpush1.msra.mxu0 0.0
        %483 = vmatprep.subr.mxu0 0.0
        %484 = vmatpush1.msra.mxu0 0.0
        %485 = vmatprep.subr.mxu0 0.0
        %486 = vmatpush1.msra.mxu0 0.0
        %487 = vmatprep.subr.mxu0 0.0
        %488 = vmatpush1.msra.mxu0 0.0
        %489 = vmatprep.subr.mxu0 0.0
        %490 = vmatpush1.msra.mxu0 0.0
        %491 = vmatprep.subr.mxu0 0.0
        %492 = vmatpush1.msra.mxu0 0.0
        %493 = vmatprep.subr.mxu0 0.0
        %494 = vmatpush1.msra.mxu0 0.0
        %495 = vmatprep.subr.mxu0 0.0
        %496 = vmatpush1.msra.mxu0 0.0
        %497 = vmatprep.subr.mxu0 0.0
        %498 = vmatpush1.msra.mxu0 0.0
        %499 = vmatprep.subr.mxu0 0.0
        %500 = vmatpush1.msra.mxu0 0.0
        %501 = vmatprep.subr.mxu0 0.0
        %502 = vmatpush1.msra.mxu0 0.0
        %503 = vmatprep.subr.mxu0 0.0
        %504 = vmatpush1.msra.mxu0 0.0
        %505 = vmatprep.subr.mxu0 0.0
        %506 = vmatpush1.msra.mxu0 0.0
        %507 = vmatprep.subr.mxu0 0.0
        %508 = vmatpush1.msra.mxu0 0.0
        %509 = vmatprep.subr.mxu0 0.0
        %510 = vmatpush1.msra.mxu0 %v467
        %511 = vmatprep.subr.mxu0 0.0
        %512 = vmatpush2.msra.mxu0 0.0
        %513 = vmatprep.subr.mxu0 0.0
        %514 = vmatpush2.msra.mxu0 0.0
        %515 = vmatprep.subr.mxu0 0.0
        %516 = vmatpush2.msra.mxu0 0.0
        %517 = vmatprep.subr.mxu0 0.0
        %518 = vmatpush2.msra.mxu0 0.0
        %519 = vmatprep.subr.mxu0 0.0
        %520 = vmatpush2.msra.mxu0 0.0
        %521 = vmatprep.subr.mxu0 0.0
        %522 = vmatpush2.msra.mxu0 0.0
        %523 = vmatprep.subr.mxu0 0.0
        %524 = vmatpush2.msra.mxu0 0.0
        %525 = vmatprep.subr.mxu0 0.0
        %526 = vmatpush2.msra.mxu0 0.0
        %527 = vmatprep.subr.mxu0 0.0
        %528 = vmatpush2.msra.mxu0 0.0
        %529 = vmatprep.subr.mxu0 0.0
        %530 = vmatpush2.msra.mxu0 0.0
        %531 = vmatprep.subr.mxu0 0.0
        %532 = vmatpush2.msra.mxu0 0.0
        %533 = vmatprep.subr.mxu0 0.0
        %534 = vmatpush2.msra.mxu0 0.0
        %535 = vmatprep.subr.mxu0 0.0
        %536 = vmatpush2.msra.mxu0 0.0
        %537 = vmatprep.subr.mxu0 0.0
        %538 = vmatpush2.msra.mxu0 0.0
        %539 = vmatprep.subr.mxu0 0.0
        %540 = vmatpush2.msra.mxu0 0.0
        %541 = vmatprep.subr.mxu0 0.0
        %542 = vmatpush2.msra.mxu0 0.0
        %543 = vmatprep.mubr.f32.mxu0 0.0
        %544 = vmatmul.mubr.f32.gmra.mxu0 %v477
        %v545 = vpop.f32.mrf.mxu0
        %v546 = vadd.f32 %v473, %v545
        %v547 = vpop.f32.mrf.mxu0
        %548 = vdwg.mxu0
        %549 = vst [vmem:[%s293] sm:$0xff] %v546
        %s550 = sand.u32 %s188, 1
        %s551 = scalar_lea.sflag [#allocation3], %s550
        %s552 = sand.u32 %s188, 1
        %s553 = smul.addr %s552, 8
        %s554 = scalar_lea.vmem [#allocation2], %s553
        // Predicated region
        $region45: #{cp_bilinear.1} parent=43 // pred_check
          %p555 = pneg %p198
        $region46: #{cp_bilinear.1} parent=43 // pred_check_branch
          %557 = sbr.rel (%p555) target = $region48
        $region47: #{cp_bilinear.1} parent=43 // pred_region
          %s559 = ssub.s32 128, 128
          %560 = vsyncadd %s551, %s559
          %s561 = sadd.s32 %s25, %s24
          %s562 = smul.addr %s561, 128
          %s563 = scalar_lea.hbm %s6, %s562
          %s565 = sshll.u32 %s554, 4
          %s566 = int_to_ptr.vmem [resolvable:$true] %s565
          %568 = dma.vmem_to_hbm [thread:$0]  %s566, 128, %s563, %s551
        $region48: #{cp_bilinear.1} parent=43 // pred_fallthru
          _
      $region44: #{cp_bilinear.1} parent=5 // pred_fallthru
        _
      %p569 = scmp.le.s32.totalorder 2, %s15
      // Predicated region
      $region49: #{cp_bilinear.1} parent=5 // pred_check
        %p570 = pneg %p569
      $region50: #{cp_bilinear.1} parent=5 // pred_check_branch
        %572 = sbr.rel (%p570) target = $region52
      $region51: #{cp_bilinear.1} parent=5 // pred_region
        %s573 = ssub.s32 %s15, 2
        // Predicated region
        $region53: #{cp_bilinear.1} parent=51 // pred_check
          %p574 = pneg %p204
        $region54: #{cp_bilinear.1} parent=51 // pred_check_branch
          %576 = sbr.rel (%p574) target = $region56
        $region55: #{cp_bilinear.1} parent=51 // pred_region
          %s577 = sand.u32 %s189, 1
          %s578 = scalar_lea.sflag [#allocation3], %s577
          %s579 = sand.u32 %s189, 1
          %s580 = smul.addr %s579, 8
          %s581 = scalar_lea.vmem [#allocation2], %s580
          %582 = dma.done %s578, 128
        $region56: #{cp_bilinear.1} parent=51 // pred_fallthru
          _
      $region52: #{cp_bilinear.1} parent=5 // pred_fallthru
        _
    $region6: #{cp_bilinear.1} parent=1 // loop_footer
      %s19 = sadd.s32 1, %s15
    $region7: #{cp_bilinear.1} parent=1 // loop_footer_branch
      %14 = sbr.rel target = $region3
    $region8: #{cp_bilinear.1} parent=1 // loop_exit
      _
    %583 = vsyncpa [#allocation3], 1
    %s584 = scalar_lea.sflag [#allocation3], 1
    %585 = vsyncpa %s584, 1

</llo_original>
